<compile_context>
chip_gen: v7x
topology: tpu7x:2x2x1
jax: 0.10.0
libtpu: 0.0.40
codegen_flags: <defaults>
</compile_context>

<pallas_src>
import math
import functools

import jax
import jax.numpy as jnp
from jax import lax
from jax.experimental import pallas as pl
from jax.experimental.pallas import tpu as pltpu


# ----------------------------------------------------------------------------
# Tiling / VMEM helpers
# ----------------------------------------------------------------------------
def _sublane_align(dtype):
    """Native sublane packing: f32 -> 8, bf16 -> 16, int8/fp8 -> 32."""
    return max(8, 32 // jnp.dtype(dtype).itemsize)


def _pick_tile(dim, desired, align):
    """Largest multiple of `align` <= desired that evenly divides `dim`;
    falls back to the full dim (a full-extent block is always legal)."""
    if dim <= desired:
        return dim
    t = (desired // align) * align
    while t >= align:
        if dim % t == 0:
            return t
        t -= align
    return dim


def _vmem_limit(nbytes):
    """Scoped-VMEM limit for a pallas_call: requested bytes + headroom,
    clamped to [32 MiB, 64 MiB] (64 MiB = v7x physical per-TC VMEM)."""
    return int(min(max(int(nbytes * 1.5) + (2 << 20), 32 << 20), 64 << 20))


# ----------------------------------------------------------------------------
# Tiled linear:  y = x @ w + b   (K-accumulator pattern, K innermost/"arbitrary")
# ----------------------------------------------------------------------------
def _matmul_bias_kernel(x_ref, w_ref, b_ref, o_ref, acc_ref, *, mxu_dtype):
    kk = pl.program_id(2)

    @pl.when(kk == 0)
    def _init():
        acc_ref[...] = jnp.zeros_like(acc_ref)

    x = x_ref[...]
    w = w_ref[...]
    if mxu_dtype is not None:            # bf16 MXU operands, f32 accumulation
        x = x.astype(mxu_dtype)
        w = w.astype(mxu_dtype)
    acc_ref[...] += jnp.dot(x, w, preferred_element_type=jnp.float32)

    @pl.when(kk == pl.num_programs(2) - 1)
    def _store():
        o_ref[...] = (acc_ref[...] + b_ref[...].astype(jnp.float32)).astype(o_ref.dtype)


def linear(x, w, b, *, tm=256, tn=1024, tk=1024, mxu_dtype=None):
    """y = x @ w + b, tiled over (M, N, K) with f32 accumulation."""
    M, K = x.shape
    _, N = w.shape
    sub = _sublane_align(x.dtype)
    tm = _pick_tile(M, tm, sub)
    tk = _pick_tile(K, tk, 128)
    tn = _pick_tile(N, tn, 128)
    grid = (M // tm, N // tn, K // tk)
    isz = x.dtype.itemsize
    vmem = 2 * (tm * tk + tk * tn + tn + tm * tn) * isz + tm * tn * 4
    return pl.pallas_call(
        functools.partial(_matmul_bias_kernel, mxu_dtype=mxu_dtype),
        out_shape=jax.ShapeDtypeStruct((M, N), x.dtype),
        grid=grid,
        in_specs=[
            pl.BlockSpec((tm, tk), lambda i, j, kk: (i, kk)),
            pl.BlockSpec((tk, tn), lambda i, j, kk: (kk, j)),
            pl.BlockSpec((1, tn), lambda i, j, kk: (0, j)),
        ],
        out_specs=pl.BlockSpec((tm, tn), lambda i, j, kk: (i, j)),
        scratch_shapes=[pltpu.VMEM((tm, tn), jnp.float32)],
        compiler_params=pltpu.CompilerParams(
            dimension_semantics=("parallel", "parallel", "arbitrary"),
            vmem_limit_bytes=_vmem_limit(vmem)),
        cost_estimate=pl.CostEstimate(
            flops=2 * M * K * N,
            transcendentals=0,
            bytes_accessed=isz * (M * K + K * N + N + M * N)),
    )(x, w, b.reshape(1, N))


# ----------------------------------------------------------------------------
# Fused Q/K/V projection for distinct q/k/v inputs: one pallas_call, three matmuls,
# packed [Q | K | V] output (same layout the attention kernel consumes).
# ----------------------------------------------------------------------------
def _qkv_proj_kernel(xq_ref, xk_ref, xv_ref, w_ref, b_ref, o_ref,
                     accq, acck, accv, *, d_model, mxu_dtype):
    kk = pl.program_id(1)

    @pl.when(kk == 0)
    def _init():
        accq[...] = jnp.zeros_like(accq)
        acck[...] = jnp.zeros_like(acck)
        accv[...] = jnp.zeros_like(accv)

    def mm(x_blk, w_blk):
        if mxu_dtype is not None:
            x_blk = x_blk.astype(mxu_dtype)
            w_blk = w_blk.astype(mxu_dtype)
        return jnp.dot(x_blk, w_blk, preferred_element_type=jnp.float32)

    accq[...] += mm(xq_ref[...], w_ref[0])
    acck[...] += mm(xk_ref[...], w_ref[1])
    accv[...] += mm(xv_ref[...], w_ref[2])

    @pl.when(kk == pl.num_programs(1) - 1)
    def _store():
        b = b_ref[...].astype(jnp.float32)            # (3, 1, d_model)
        dm = d_model
        # Per-projection lane-range stores into the packed output block.
        o_ref[:, 0:dm] = (accq[...] + b[0]).astype(o_ref.dtype)
        o_ref[:, dm:2 * dm] = (acck[...] + b[1]).astype(o_ref.dtype)
        o_ref[:, 2 * dm:3 * dm] = (accv[...] + b[2]).astype(o_ref.dtype)


def qkv_projection(xq, xk, xv, w_stacked, b_stacked, *, tm=256, tk=512, mxu_dtype=None):
    """(xq@Wq+bq | xk@Wk+bk | xv@Wv+bv) packed into one (M, 3*d_model) array,
    in a single pallas_call.  w_stacked: (3, dm, dm), b_stacked: (3, 1, dm)."""
    M, K = xq.shape
    N = w_stacked.shape[2]
    isz = xq.dtype.itemsize
    sub = _sublane_align(xq.dtype)
    # Keep the double-buffered (3, tk, N) weight panel modest (v7x: 64 MiB VMEM total).
    while tk > 128 and 3 * tk * N * isz * 2 > (20 << 20):
        tk //= 2
    # Accumulators (3 * tm * N f32) + double-buffered packed output (tm, 3N).
    while tm > sub and tm * N * (3 * 4 + 3 * 2 * isz) > (24 << 20):
        tm //= 2
    tm = _pick_tile(M, tm, sub)
    tk = _pick_tile(K, tk, 128)
    grid = (M // tm, K // tk)
    x_spec = pl.BlockSpec((tm, tk), lambda i, kk: (i, kk))
    vmem = (2 * (3 * tm * tk + 3 * tk * N + 3 * N + tm * 3 * N) * isz
            + 3 * tm * N * 4)
    return pl.pallas_call(
        functools.partial(_qkv_proj_kernel, d_model=N, mxu_dtype=mxu_dtype),
        out_shape=jax.ShapeDtypeStruct((M, 3 * N), xq.dtype),
        grid=grid,
        in_specs=[
            x_spec, x_spec, x_spec,
            pl.BlockSpec((3, tk, N), lambda i, kk: (0, kk, 0)),
            pl.BlockSpec((3, 1, N), lambda i, kk: (0, 0, 0)),
        ],
        out_specs=pl.BlockSpec((tm, 3 * N), lambda i, kk: (i, 0)),
        scratch_shapes=[pltpu.VMEM((tm, N), jnp.float32) for _ in range(3)],
        compiler_params=pltpu.CompilerParams(
            dimension_semantics=("parallel", "arbitrary"),
            vmem_limit_bytes=_vmem_limit(vmem)),
        cost_estimate=pl.CostEstimate(
            flops=3 * 2 * M * K * N,
            transcendentals=0,
            bytes_accessed=isz * (3 * M * K + 3 * K * N + 3 * N + 3 * M * N)),
    )(xq, xk, xv, w_stacked, b_stacked)


# ----------------------------------------------------------------------------
# Attention on the packed [Q | K | V] activation.
#   grid = (batch, query-tile); heads / Q / K / V are lane slices inside the kernel.
#   Per-head outputs are stored directly (no concatenate, bounded live ranges).
# ----------------------------------------------------------------------------
def _attention_kernel(qp_ref, kvp_ref, o_ref, *, heads, d_k, d_model,
                      mxu_dtype, approx_recip):
    # qp_ref : (tq,    3*d_model) packed rows for this query tile (only Q lanes used)
    # kvp_ref: (sl_kv, 3*d_model) packed rows for the whole sequence (K/V lanes used)
    # 1/sqrt(d_k) is already folded into Wq, so no per-token scale here.
    for h in range(heads):                               # static unroll
        lo = h * d_k
        qh = qp_ref[:, lo:lo + d_k]
        kh = kvp_ref[:, d_model + lo:d_model + lo + d_k]
        vh = kvp_ref[:, 2 * d_model + lo:2 * d_model + lo + d_k]
        if mxu_dtype is not None:
            qh = qh.astype(mxu_dtype)
            kh = kh.astype(mxu_dtype)
            vh = vh.astype(mxu_dtype)
        # q . k^T without materializing the transpose: contract the last dims.
        s = lax.dot_general(qh, kh, (((1,), (1,)), ((), ())),
                            preferred_element_type=jnp.float32)
        s = s - jnp.max(s, axis=-1, keepdims=True)       # stable softmax, f32
        p = jnp.exp(s)
        denom = jnp.sum(p, axis=-1, keepdims=True)
        if approx_recip:
            # Approx EUP reciprocal only for bf16 activations (error ~2^-8 rel).
            p = p * pl.reciprocal(denom, approx=True)
        else:
            p = p / denom
        out_h = jnp.dot(p.astype(vh.dtype), vh, preferred_element_type=jnp.float32)
        # Direct per-head store: frees this head's tiles immediately; the final
        # HBM writeback of the whole (tq, d_model) block is still one dense DMA.
        o_ref[:, lo:lo + d_k] = out_h.astype(o_ref.dtype)


def mha_attention_packed(qkv_packed, heads, *, tq=256, mxu_dtype=None,
                         approx_recip=False):
    """qkv_packed: (bs, sl, 3*d_model) lanes = [Q | K | V] -> (bs, sl, d_model)."""
    bs, sl, dm3 = qkv_packed.shape
    dm = dm3 // 3
    d_k = dm // heads
    sub = _sublane_align(qkv_packed.dtype)
    tq = _pick_tile(sl, tq, sub)
    n_q = sl // tq
    isz = qkv_packed.dtype.itemsize
    vmem = (2 * (tq * dm3 + sl * dm3 + tq * dm) * isz   # double-buffered q/kv/out blocks
            + tq * sl * 4 + tq * dm * 4)                # one live f32 score tile + head out
    kern = functools.partial(_attention_kernel, heads=heads, d_k=d_k, d_model=dm,
                             mxu_dtype=mxu_dtype, approx_recip=approx_recip)
    # The packed array is passed twice: a query-tiled view (Q lanes) and a
    # full-sequence view (K/V lanes).  Both use the full 3*d_model lane extent so the
    # block shapes are legal for any d_model (not just multiples of 128).
    q_spec = pl.BlockSpec((None, tq, dm3), lambda b, qi: (b, qi, 0))
    kv_spec = pl.BlockSpec((None, sl, dm3), lambda b, qi: (b, 0, 0))
    o_spec = pl.BlockSpec((None, tq, dm), lambda b, qi: (b, qi, 0))
    return pl.pallas_call(
        kern,
        out_shape=jax.ShapeDtypeStruct((bs, sl, dm), qkv_packed.dtype),
        grid=(bs, n_q),
        in_specs=[q_spec, kv_spec],
        out_specs=o_spec,
        compiler_params=pltpu.CompilerParams(
            dimension_semantics=("parallel", "parallel"),
            vmem_limit_bytes=_vmem_limit(vmem)),
        cost_estimate=pl.CostEstimate(
            flops=bs * heads * (4 * sl * sl * d_k + 6 * sl * sl),
            transcendentals=bs * heads * sl * sl,
            bytes_accessed=isz * bs * sl * (2 * dm3 + dm)),
    )(qkv_packed, qkv_packed)


# ----------------------------------------------------------------------------
# MultiHeadAttention wrapper (parameter setup + glue; no HBM transposes/slice copies)
# ----------------------------------------------------------------------------
class MultiHeadAttentionPallas:
    """Eval-mode MultiHeadAttention (dropout = identity); matches the torch forward."""

    def __init__(self, heads, d_model, key, dtype=jnp.float32, mxu_dtype=None):
        assert d_model % heads == 0
        self.h = heads
        self.d_model = d_model
        self.d_k = d_model // heads
        self.mxu_dtype = mxu_dtype
        ks = jax.random.split(key, 8)
        scale = 1.0 / math.sqrt(d_model)

        def init(k, shape):
            return (jax.random.normal(k, shape, jnp.float32) * scale).astype(dtype)

        # Weights stored as (in, out) so kernels compute x @ W + b
        # (matches torch's x @ W_torch.T + b).
        self.Wq = init(ks[0], (d_model, d_model)); self.bq = init(ks[1], (d_model,))
        self.Wk = init(ks[2], (d_model, d_model)); self.bk = init(ks[3], (d_model,))
        self.Wv = init(ks[4], (d_model, d_model)); self.bv = init(ks[5], (d_model,))
        self.Wo = init(ks[6], (d_model, d_model)); self.bo = init(ks[7], (d_model,))

        # Fold 1/sqrt(d_k) into the Q projection once at init (removes a per-token
        # VPU pass in the attention kernel and a bf16 precision loss).
        sm = 1.0 / math.sqrt(self.d_k)
        Wq_s = (self.Wq.astype(jnp.float32) * sm).astype(dtype)
        bq_s = (self.bq.astype(jnp.float32) * sm).astype(dtype)

        # Fused parameter views (built once at init).
        self.Wqkv_wide = jnp.concatenate([Wq_s, self.Wk, self.Wv], axis=1)      # (dm, 3dm)
        self.bqkv_wide = jnp.concatenate([bq_s, self.bk, self.bv])              # (3dm,)
        self.Wqkv_stacked = jnp.stack([Wq_s, self.Wk, self.Wv])                 # (3, dm, dm)
        self.bqkv_stacked = jnp.stack([bq_s, self.bk, self.bv])[:, None, :]     # (3, 1, dm)

    def __call__(self, q, k, v, mask=None):
        if mask is not None:
            # TODO(synk): masked-fill (scores.masked_fill(mask == 0, -1e9)) path.
            raise NotImplementedError("attention mask path not implemented")
        # Dropout is eval-mode (identity).
        bs, sl, dm = q.shape
        # Exact softmax divide for f32 activations; approx EUP reciprocal only for bf16.
        approx = jnp.dtype(q.dtype) == jnp.dtype(jnp.bfloat16)

        if (q is k) and (q is v):
            # Self-attention: x @ [Wq|Wk|Wv] -- x read from HBM once, 3x wider MXU N.
            # Output is already the packed [Q|K|V] layout: NO HBM slice copies.
            qkv = linear(q.reshape(bs * sl, dm), self.Wqkv_wide, self.bqkv_wide,
                         mxu_dtype=self.mxu_dtype)
        else:
            # Distinct q/k/v: one fused pallas_call does all three projections and
            # writes the same packed [Q|K|V] layout (no stacking / slicing copies).
            qkv = qkv_projection(q.reshape(bs * sl, dm), k.reshape(bs * sl, dm),
                                 v.reshape(bs * sl, dm),
                                 self.Wqkv_stacked, self.bqkv_stacked,
                                 mxu_dtype=self.mxu_dtype)

        # Packed (bs, sl, 3*d_model) flows straight into the attention kernel;
        # heads / Q / K / V are lane slices inside -> no HBM-materialized transposes.
        attn = mha_attention_packed(qkv.reshape(bs, sl, 3 * dm), self.h,
                                    mxu_dtype=self.mxu_dtype, approx_recip=approx)

        out = linear(attn.reshape(bs * sl, dm), self.Wo, self.bo,
                     mxu_dtype=self.mxu_dtype)
        return out.reshape(bs, sl, dm)


def _reference(mha, q, k, v):
    """Pure-JAX f32 reference of the torch forward (eval mode, mask=None)."""
    bs, sl, dm = q.shape
    h, d_k = mha.h, mha.d_k
    f32 = jnp.float32

    def proj(x, W, b):
        y = x.reshape(-1, dm).astype(f32) @ W.astype(f32) + b.astype(f32)
        return y.reshape(bs, sl, h, d_k).transpose(0, 2, 1, 3)

    qp, kp, vp = proj(q, mha.Wq, mha.bq), proj(k, mha.Wk, mha.bk), proj(v, mha.Wv, mha.bv)
    scores = jnp.einsum("bhqd,bhkd->bhqk", qp, kp) / math.sqrt(d_k)
    p = jax.nn.softmax(scores, axis=-1)
    o = jnp.einsum("bhqk,bhkd->bhqd", p, vp)
    o = o.transpose(0, 2, 1, 3).reshape(bs * sl, dm)
    return (o @ mha.Wo.astype(f32) + mha.bo.astype(f32)).reshape(bs, sl, dm)


if __name__ == "__main__":
    key = jax.random.PRNGKey(0)
    k_param, k_q, k_k, k_v = jax.random.split(key, 4)

    heads, d_model = 4, 32
    bs, sl = 2, 8

    mha = MultiHeadAttentionPallas(heads, d_model, k_param)

    q = jax.random.normal(k_q, (bs, sl, d_model), jnp.float32)
    k = jax.random.normal(k_k, (bs, sl, d_model), jnp.float32)
    v = jax.random.normal(k_v, (bs, sl, d_model), jnp.float32)

    # Cross-attention (distinct q/k/v) -> fused 3-way projection kernel (packed output).
    out = jax.block_until_ready(mha(q, k, v))
    ref = _reference(mha, q, k, v)
    assert out.shape == (bs, sl, d_model)
    assert jnp.allclose(out, ref, atol=2e-2, rtol=2e-2), "cross-attention mismatch"

    # Self-attention (q is k is v) -> wide [Wq|Wk|Wv] projection, packed straight into
    # the attention kernel (no HBM slice copies), exact softmax divide.
    out_self = jax.block_until_ready(mha(q, q, q))
    ref_self = _reference(mha, q, q, q)
    assert jnp.allclose(out_self, ref_self, atol=2e-2, rtol=2e-2), "self-attention mismatch"

    # bf16 MXU operands with f32 accumulation (fast path): loose sanity check only,
    # since the reference is full f32.
    mha_bf16 = MultiHeadAttentionPallas(heads, d_model, k_param, mxu_dtype=jnp.bfloat16)
    out_bf16 = jax.block_until_ready(mha_bf16(q, q, q))
    assert jnp.all(jnp.isfinite(out_bf16)), "bf16 MXU path produced non-finite values"
    assert jnp.allclose(out_bf16, ref_self, atol=2e-1, rtol=2e-1), "bf16 MXU path mismatch"

    print("KERNEL_OK")
</pallas_src>

<mosaic_0001>
module attributes {stable_mosaic.version = 11 : i64} {
  func.func @_qkv_proj_kernel(%arg0: i32, %arg1: i32, %arg2: memref<16x32xf32, #tpu.memory_space<vmem>>, %arg3: memref<16x32xf32, #tpu.memory_space<vmem>>, %arg4: memref<16x32xf32, #tpu.memory_space<vmem>>, %arg5: memref<3x32x32xf32, #tpu.memory_space<vmem>>, %arg6: memref<3x1x32xf32, #tpu.memory_space<vmem>>, %arg7: memref<16x96xf32, #tpu.memory_space<vmem>>, %arg8: memref<16x32xf32, #tpu.memory_space<vmem>>, %arg9: memref<16x32xf32, #tpu.memory_space<vmem>>, %arg10: memref<16x32xf32, #tpu.memory_space<vmem>>) attributes {dimension_semantics = [#tpu.dimension_semantics<parallel>, #tpu.dimension_semantics<arbitrary>], iteration_bounds = array<i64: 1, 1>, scalar_prefetch = 0 : i64, scratch_operands = 3 : i64, tpu.core_type = #tpu.core_type<tc>, window_params = [{transform_indices = @transform_0, window_bounds = array<i64: 16, 32>}, {transform_indices = @transform_1, window_bounds = array<i64: 16, 32>}, {transform_indices = @transform_2, window_bounds = array<i64: 16, 32>}, {transform_indices = @transform_3, window_bounds = array<i64: 3, 32, 32>}, {pipeline_mode = #tpu.pipeline_mode<synchronous>, transform_indices = @transform_4, window_bounds = array<i64: 3, 1, 32>}, {transform_indices = @transform_5, window_bounds = array<i64: 16, 96>}]} {
    %c0_i32 = arith.constant 0 : i32
    %0 = arith.cmpi eq, %arg1, %c0_i32 : i32
    %1 = arith.extui %0 : i1 to i32
    %c0_i32_0 = arith.constant 0 : i32
    %2 = arith.cmpi ne, %1, %c0_i32_0 : i32
    scf.if %2 {
      %cst_29 = arith.constant 0.000000e+00 : f32
      %27 = vector.broadcast %cst_29 : f32 to vector<16x32xf32>
      %c0_30 = arith.constant 0 : index
      %c0_31 = arith.constant 0 : index
      %28 = vector.load %arg8[%c0_30, %c0_31] : memref<16x32xf32, #tpu.memory_space<vmem>>, vector<16x32xf32>
      tpu.vector_store %arg8[%c0_30, %c0_31], %27 {strides = array<i32>} : memref<16x32xf32, #tpu.memory_space<vmem>>, vector<16x32xf32>,
      %cst_32 = arith.constant 0.000000e+00 : f32
      %29 = vector.broadcast %cst_32 : f32 to vector<16x32xf32>
      %c0_33 = arith.constant 0 : index
      %c0_34 = arith.constant 0 : index
      %30 = vector.load %arg9[%c0_33, %c0_34] : memref<16x32xf32, #tpu.memory_space<vmem>>, vector<16x32xf32>
      tpu.vector_store %arg9[%c0_33, %c0_34], %29 {strides = array<i32>} : memref<16x32xf32, #tpu.memory_space<vmem>>, vector<16x32xf32>,
      %cst_35 = arith.constant 0.000000e+00 : f32
      %31 = vector.broadcast %cst_35 : f32 to vector<16x32xf32>
      %c0_36 = arith.constant 0 : index
      %c0_37 = arith.constant 0 : index
      %32 = vector.load %arg10[%c0_36, %c0_37] : memref<16x32xf32, #tpu.memory_space<vmem>>, vector<16x32xf32>
      tpu.vector_store %arg10[%c0_36, %c0_37], %31 {strides = array<i32>} : memref<16x32xf32, #tpu.memory_space<vmem>>, vector<16x32xf32>,
    } else {
    }
    %c0 = arith.constant 0 : index
    %c0_1 = arith.constant 0 : index
    %3 = vector.load %arg8[%c0, %c0_1] : memref<16x32xf32, #tpu.memory_space<vmem>>, vector<16x32xf32>
    %c0_2 = arith.constant 0 : index
    %c0_3 = arith.constant 0 : index
    %4 = vector.load %arg2[%c0_2, %c0_3] : memref<16x32xf32, #tpu.memory_space<vmem>>, vector<16x32xf32>
    %c0_4 = arith.constant 0 : index
    %c0_5 = arith.constant 0 : index
    %c0_6 = arith.constant 0 : index
    %5 = vector.load %arg5[%c0_4, %c0_5, %c0_6] : memref<3x32x32xf32, #tpu.memory_space<vmem>>, vector<1x32x32xf32>
    %6 = vector.shape_cast %5 : vector<1x32x32xf32> to vector<32x32xf32>
    %cst = arith.constant dense<0.000000e+00> : vector<16x32xf32>
    %7 = tpu.matmul %4, %6, %cst {dimension_numbers = #tpu.dot_dimension_numbers<[1], [0], [0], [1], [0, 0, 1, 1], [], []>} : vector<16x32xf32>, vector<32x32xf32>, vector<16x32xf32> -> vector<16x32xf32>
    %8 = arith.addf %3, %7 : vector<16x32xf32>
    %c0_7 = arith.constant 0 : index
    %c0_8 = arith.constant 0 : index
    %9 = vector.load %arg8[%c0_7, %c0_8] : memref<16x32xf32, #tpu.memory_space<vmem>>, vector<16x32xf32>
    tpu.vector_store %arg8[%c0_7, %c0_8], %8 {strides = array<i32>} : memref<16x32xf32, #tpu.memory_space<vmem>>, vector<16x32xf32>,
    %c0_9 = arith.constant 0 : index
    %c0_10 = arith.constant 0 : index
    %10 = vector.load %arg9[%c0_9, %c0_10] : memref<16x32xf32, #tpu.memory_space<vmem>>, vector<16x32xf32>
    %c0_11 = arith.constant 0 : index
    %c0_12 = arith.constant 0 : index
    %11 = vector.load %arg3[%c0_11, %c0_12] : memref<16x32xf32, #tpu.memory_space<vmem>>, vector<16x32xf32>
    %c1 = arith.constant 1 : index
    %c0_13 = arith.constant 0 : index
    %c0_14 = arith.constant 0 : index
    %12 = vector.load %arg5[%c1, %c0_13, %c0_14] : memref<3x32x32xf32, #tpu.memory_space<vmem>>, vector<1x32x32xf32>
    %13 = vector.shape_cast %12 : vector<1x32x32xf32> to vector<32x32xf32>
    %cst_15 = arith.constant dense<0.000000e+00> : vector<16x32xf32>
    %14 = tpu.matmul %11, %13, %cst_15 {dimension_numbers = #tpu.dot_dimension_numbers<[1], [0], [0], [1], [0, 0, 1, 1], [], []>} : vector<16x32xf32>, vector<32x32xf32>, vector<16x32xf32> -> vector<16x32xf32>
    %15 = arith.addf %10, %14 : vector<16x32xf32>
    %c0_16 = arith.constant 0 : index
    %c0_17 = arith.constant 0 : index
    %16 = vector.load %arg9[%c0_16, %c0_17] : memref<16x32xf32, #tpu.memory_space<vmem>>, vector<16x32xf32>
    tpu.vector_store %arg9[%c0_16, %c0_17], %15 {strides = array<i32>} : memref<16x32xf32, #tpu.memory_space<vmem>>, vector<16x32xf32>,
    %c0_18 = arith.constant 0 : index
    %c0_19 = arith.constant 0 : index
    %17 = vector.load %arg10[%c0_18, %c0_19] : memref<16x32xf32, #tpu.memory_space<vmem>>, vector<16x32xf32>
    %c0_20 = arith.constant 0 : index
    %c0_21 = arith.constant 0 : index
    %18 = vector.load %arg4[%c0_20, %c0_21] : memref<16x32xf32, #tpu.memory_space<vmem>>, vector<16x32xf32>
    %c2 = arith.constant 2 : index
    %c0_22 = arith.constant 0 : index
    %c0_23 = arith.constant 0 : index
    %19 = vector.load %arg5[%c2, %c0_22, %c0_23] : memref<3x32x32xf32, #tpu.memory_space<vmem>>, vector<1x32x32xf32>
    %20 = vector.shape_cast %19 : vector<1x32x32xf32> to vector<32x32xf32>
    %cst_24 = arith.constant dense<0.000000e+00> : vector<16x32xf32>
    %21 = tpu.matmul %18, %20, %cst_24 {dimension_numbers = #tpu.dot_dimension_numbers<[1], [0], [0], [1], [0, 0, 1, 1], [], []>} : vector<16x32xf32>, vector<32x32xf32>, vector<16x32xf32> -> vector<16x32xf32>
    %22 = arith.addf %17, %21 : vector<16x32xf32>
    %c0_25 = arith.constant 0 : index
    %c0_26 = arith.constant 0 : index
    %23 = vector.load %arg10[%c0_25, %c0_26] : memref<16x32xf32, #tpu.memory_space<vmem>>, vector<16x32xf32>
    tpu.vector_store %arg10[%c0_25, %c0_26], %22 {strides = array<i32>} : memref<16x32xf32, #tpu.memory_space<vmem>>, vector<16x32xf32>,
    %c0_i32_27 = arith.constant 0 : i32
    %24 = arith.cmpi eq, %arg1, %c0_i32_27 : i32
    %25 = arith.extui %24 : i1 to i32
    %c0_i32_28 = arith.constant 0 : i32
    %26 = arith.cmpi ne, %25, %c0_i32_28 : i32
    scf.if %26 {
      %c0_29 = arith.constant 0 : index
      %c0_30 = arith.constant 0 : index
      %c0_31 = arith.constant 0 : index
      %27 = vector.load %arg6[%c0_29, %c0_30, %c0_31] : memref<3x1x32xf32, #tpu.memory_space<vmem>>, vector<3x1x32xf32>
      %c0_32 = arith.constant 0 : index
      %c0_33 = arith.constant 0 : index
      %28 = vector.load %arg8[%c0_32, %c0_33] : memref<16x32xf32, #tpu.memory_space<vmem>>, vector<16x32xf32>
      %29 = vector.extract_strided_slice %27 {offsets = [0, 0, 0], sizes = [1, 1, 32], strides = [1, 1, 1]} : vector<3x1x32xf32> to vector<1x1x32xf32>
      %30 = vector.shape_cast %29 : vector<1x1x32xf32> to vector<1x32xf32>
      %31 = vector.broadcast %30 : vector<1x32xf32> to vector<16x32xf32>
      %32 = arith.addf %28, %31 : vector<16x32xf32>
      %c0_34 = arith.constant 0 : index
      %c0_35 = arith.constant 0 : index
      %33 = vector.load %arg7[%c0_34, %c0_35] : memref<16x96xf32, #tpu.memory_space<vmem>>, vector<16x32xf32>
      tpu.vector_store %arg7[%c0_34, %c0_35], %32 {strides = array<i32>} : memref<16x96xf32, #tpu.memory_space<vmem>>, vector<16x32xf32>,
      %c0_36 = arith.constant 0 : index
      %c0_37 = arith.constant 0 : index
      %34 = vector.load %arg9[%c0_36, %c0_37] : memref<16x32xf32, #tpu.memory_space<vmem>>, vector<16x32xf32>
      %35 = vector.extract_strided_slice %27 {offsets = [1, 0, 0], sizes = [1, 1, 32], strides = [1, 1, 1]} : vector<3x1x32xf32> to vector<1x1x32xf32>
      %36 = vector.shape_cast %35 : vector<1x1x32xf32> to vector<1x32xf32>
      %37 = vector.broadcast %36 : vector<1x32xf32> to vector<16x32xf32>
      %38 = arith.addf %34, %37 : vector<16x32xf32>
      %c0_38 = arith.constant 0 : index
      %c32 = arith.constant 32 : index
      %39 = vector.load %arg7[%c0_38, %c32] : memref<16x96xf32, #tpu.memory_space<vmem>>, vector<16x32xf32>
      tpu.vector_store %arg7[%c0_38, %c32], %38 {strides = array<i32>} : memref<16x96xf32, #tpu.memory_space<vmem>>, vector<16x32xf32>,
      %c0_39 = arith.constant 0 : index
      %c0_40 = arith.constant 0 : index
      %40 = vector.load %arg10[%c0_39, %c0_40] : memref<16x32xf32, #tpu.memory_space<vmem>>, vector<16x32xf32>
      %41 = vector.extract_strided_slice %27 {offsets = [2, 0, 0], sizes = [1, 1, 32], strides = [1, 1, 1]} : vector<3x1x32xf32> to vector<1x1x32xf32>
      %42 = vector.shape_cast %41 : vector<1x1x32xf32> to vector<1x32xf32>
      %43 = vector.broadcast %42 : vector<1x32xf32> to vector<16x32xf32>
      %44 = arith.addf %40, %43 : vector<16x32xf32>
      %c0_41 = arith.constant 0 : index
      %c64 = arith.constant 64 : index
      %45 = vector.load %arg7[%c0_41, %c64] : memref<16x96xf32, #tpu.memory_space<vmem>>, vector<16x32xf32>
      tpu.vector_store %arg7[%c0_41, %c64], %44 {strides = array<i32>} : memref<16x96xf32, #tpu.memory_space<vmem>>, vector<16x32xf32>,
    } else {
    }
    return
  }
  func.func @transform_0(%arg0: i32, %arg1: i32) -> (i32, i32) {
    %c0_i32 = arith.constant 0 : i32
    return %arg0, %arg1 : i32, i32
  }
  func.func @transform_1(%arg0: i32, %arg1: i32) -> (i32, i32) {
    %c0_i32 = arith.constant 0 : i32
    return %arg0, %arg1 : i32, i32
  }
  func.func @transform_2(%arg0: i32, %arg1: i32) -> (i32, i32) {
    %c0_i32 = arith.constant 0 : i32
    return %arg0, %arg1 : i32, i32
  }
  func.func @transform_3(%arg0: i32, %arg1: i32) -> (i32, i32, i32) {
    %c0_i32 = arith.constant 0 : i32
    %c0_i32_0 = arith.constant 0 : i32
    %c0_i32_1 = arith.constant 0 : i32
    return %c0_i32, %arg1, %c0_i32_0 : i32, i32, i32
  }
  func.func @transform_4(%arg0: i32, %arg1: i32) -> (i32, i32, i32) {
    %c0_i32 = arith.constant 0 : i32
    %c0_i32_0 = arith.constant 0 : i32
    %c0_i32_1 = arith.constant 0 : i32
    %c0_i32_2 = arith.constant 0 : i32
    return %c0_i32, %c0_i32_0, %c0_i32_1 : i32, i32, i32
  }
  func.func @transform_5(%arg0: i32, %arg1: i32) -> (i32, i32) {
    %c0_i32 = arith.constant 0 : i32
    %c0_i32_0 = arith.constant 0 : i32
    return %arg0, %c0_i32 : i32, i32
  }
}

</mosaic_0001>

<llo_original>
// kernel: tpu_custom_call.1
$region0: #{tpu_custom_call.1}
  #allocation0 [shape = 'u32[]', space=smem, size = 0x4, offset = 0x4, fixed_abs, tag = 'smem constant byte address 0x4 - core index']
  #allocation1 [shape = 'u32[144,128]{1,0:T(1,128)}', space=vmem, size = 0x12000, scoped, tag = 'internal scratch']
  #allocation2 [shape = 'f32[16,32]{1,0:T(8,128)}', space=vmem, size = 0x2000, scoped, tag = 'scratch operand']
  #allocation3 [shape = 'f32[16,32]{1,0:T(8,128)}', space=vmem, size = 0x2000, scoped, tag = 'scratch operand']
  #allocation4 [shape = 'f32[16,32]{1,0:T(8,128)}', space=vmem, size = 0x2000, scoped, tag = 'scratch operand']
  %s0 = inlined_call_operand.hbm [shape: f32[16,32], index: 0, kind: input, shape index: {}]
  %s1 = inlined_call_operand.hbm [shape: f32[16,32], index: 1, kind: input, shape index: {}]
  %s2 = inlined_call_operand.hbm [shape: f32[16,32], index: 2, kind: input, shape index: {}]
  %s3 = inlined_call_operand.hbm [shape: f32[3,32,32], index: 3, kind: input, shape index: {}]
  %s4 = inlined_call_operand.vmem [shape: f32[3,1,32], index: 4, kind: input, shape index: {}]
  %s5 = inlined_call_operand.hbm [shape: f32[16,96], index: 5, kind: output, shape index: {}]
  %s6 = sld [smem:[#allocation0]]
  $region54: #{tpu_custom_call.1} parent=0
    _
  %s8 = ssub.s32 1, %s6
  %s9 = scalar_select 0, %s8, %s6
  $region1: #{tpu_custom_call.1} parent=0
    #allocation5 [shape = 'u8[8192]{0}', space=vmem, size = 0x2000, scoped, tag = 'input window, operand 0, single buffered']
    #allocation6 [shape = 's32[1]{0}', space=sflag, size = 0x4, scoped, tag = 'scoped memory for tpu_custom_call.1']
    #allocation7 [shape = 's32[1]{0}', space=sflag, size = 0x4, scoped, tag = 'scoped memory for tpu_custom_call.1']
    #allocation8 [shape = 'u8[8192]{0}', space=vmem, size = 0x2000, scoped, tag = 'input window, operand 1, single buffered']
    #allocation9 [shape = 's32[1]{0}', space=sflag, size = 0x4, scoped, tag = 'scoped memory for tpu_custom_call.1']
    #allocation10 [shape = 'u8[8192]{0}', space=vmem, size = 0x2000, scoped, tag = 'input window, operand 2, single buffered']
    #allocation11 [shape = 'u8[49152]{0}', space=vmem, size = 0xc000, scoped, tag = 'input window, operand 3, single buffered']
    #allocation12 [shape = 's32[1]{0}', space=sflag, size = 0x4, scoped, tag = 'scoped memory for tpu_custom_call.1']
    #allocation13 [shape = 'u8[8192]{0}', space=vmem, size = 0x2000, scoped, tag = 'output window, operand 0, single buffered']
    %10 = vsyncpa [#allocation6], 0
    %11 = vsyncpa [#allocation9], 0
    %12 = vsyncpa [#allocation12], 0
    %13 = vsyncpa [#allocation7], 0
    // Predicated region
    $region2: #{tpu_custom_call.1} parent=1 // pred_check
      _
    $region3: #{tpu_custom_call.1} parent=1 // pred_check_branch
      %15 = sbr.rel (0) target = $region5
    $region4: #{tpu_custom_call.1} parent=1 // pred_region
      %s17 = ssub.s32 256, 256
      %18 = vsyncadd [#allocation6], %s17
      %s19 = sshll.u32 [#allocation5], 4
      %s20 = int_to_ptr.vmem [resolvable:$true] %s19
      %25 = dma.hbm_to_vmem [thread:$0]  %s0, 256, %s20, [#allocation6], 128, 128, 8
    $region5: #{tpu_custom_call.1} parent=1 // pred_fallthru
      _
    // Predicated region
    $region6: #{tpu_custom_call.1} parent=1 // pred_check
      _
    $region7: #{tpu_custom_call.1} parent=1 // pred_check_branch
      %27 = sbr.rel (0) target = $region9
    $region8: #{tpu_custom_call.1} parent=1 // pred_region
      %s29 = ssub.s32 256, 256
      %30 = vsyncadd [#allocation9], %s29
      %s31 = sshll.u32 [#allocation8], 4
      %s32 = int_to_ptr.vmem [resolvable:$true] %s31
      %37 = dma.hbm_to_vmem [thread:$0]  %s1, 256, %s32, [#allocation9], 128, 128, 8
    $region9: #{tpu_custom_call.1} parent=1 // pred_fallthru
      _
    // Predicated region
    $region10: #{tpu_custom_call.1} parent=1 // pred_check
      _
    $region11: #{tpu_custom_call.1} parent=1 // pred_check_branch
      %39 = sbr.rel (0) target = $region13
    $region12: #{tpu_custom_call.1} parent=1 // pred_region
      %s41 = ssub.s32 256, 256
      %42 = vsyncadd [#allocation9], %s41
      %s43 = sshll.u32 [#allocation10], 4
      %s44 = int_to_ptr.vmem [resolvable:$true] %s43
      %49 = dma.hbm_to_vmem [thread:$0]  %s2, 256, %s44, [#allocation9], 128, 128, 8
    $region13: #{tpu_custom_call.1} parent=1 // pred_fallthru
      _
    // Predicated region
    $region14: #{tpu_custom_call.1} parent=1 // pred_check
      _
    $region15: #{tpu_custom_call.1} parent=1 // pred_check_branch
      %51 = sbr.rel (0) target = $region17
    $region16: #{tpu_custom_call.1} parent=1 // pred_region
      %s53 = ssub.s32 1536, 1536
      %54 = vsyncadd [#allocation12], %s53
      %s55 = sshll.u32 [#allocation11], 4
      %s56 = int_to_ptr.vmem [resolvable:$true] %s55
      %61 = dma.hbm_to_vmem [thread:$0]  %s3, 1536, %s56, [#allocation12], 128, 128, 8
    $region17: #{tpu_custom_call.1} parent=1 // pred_fallthru
      _
    // Predicated region
    $region18: #{tpu_custom_call.1} parent=1 // pred_check
      _
    $region19: #{tpu_custom_call.1} parent=1 // pred_check_branch
      %63 = sbr.rel (0) target = $region21
    $region20: #{tpu_custom_call.1} parent=1 // pred_region
      _
    $region21: #{tpu_custom_call.1} parent=1 // pred_fallthru
      _
    // Predicated region
    $region22: #{tpu_custom_call.1} parent=1 // pred_check
      _
    $region23: #{tpu_custom_call.1} parent=1 // pred_check_branch
      %65 = sbr.rel (0) target = $region25
    $region24: #{tpu_custom_call.1} parent=1 // pred_region
      %66 = dma.done [#allocation6], 256
    $region25: #{tpu_custom_call.1} parent=1 // pred_fallthru
      _
    // Predicated region
    $region26: #{tpu_custom_call.1} parent=1 // pred_check
      _
    $region27: #{tpu_custom_call.1} parent=1 // pred_check_branch
      %68 = sbr.rel (0) target = $region29
    $region28: #{tpu_custom_call.1} parent=1 // pred_region
      %69 = dma.done [#allocation9], 256
    $region29: #{tpu_custom_call.1} parent=1 // pred_fallthru
      _
    // Predicated region
    $region30: #{tpu_custom_call.1} parent=1 // pred_check
      _
    $region31: #{tpu_custom_call.1} parent=1 // pred_check_branch
      %71 = sbr.rel (0) target = $region33
    $region32: #{tpu_custom_call.1} parent=1 // pred_region
      %72 = dma.done [#allocation9], 256
    $region33: #{tpu_custom_call.1} parent=1 // pred_fallthru
      _
    // Predicated region
    $region34: #{tpu_custom_call.1} parent=1 // pred_check
      _
    $region35: #{tpu_custom_call.1} parent=1 // pred_check_branch
      %74 = sbr.rel (0) target = $region37
    $region36: #{tpu_custom_call.1} parent=1 // pred_region
      %75 = dma.done [#allocation12], 1536
    $region37: #{tpu_custom_call.1} parent=1 // pred_fallthru
      _
    %p76 = scmp.eq.s32.totalorder 0, 0
    // Predicated region
    $region38: #{tpu_custom_call.1} parent=1 // pred_check
      %p77 = pneg %p76
    $region39: #{tpu_custom_call.1} parent=1 // pred_check_branch
      %79 = sbr.rel (%p77) target = $region41
    $region40: #{tpu_custom_call.1} parent=1 // pred_region
      %vm80 = vcmask 261120
      %81 = vst.msk [vmem:[#allocation2] sm:$0xff] %vm80, 0.0
      %82 = vst.msk [vmem:[#allocation2 + $0x8] sm:$0xff] %vm80, 0.0
      %83 = vst.msk [vmem:[#allocation3] sm:$0xff] %vm80, 0.0
      %84 = vst.msk [vmem:[#allocation3 + $0x8] sm:$0xff] %vm80, 0.0
      %85 = vst.msk [vmem:[#allocation4] sm:$0xff] %vm80, 0.0
      %86 = vst.msk [vmem:[#allocation4 + $0x8] sm:$0xff] %vm80, 0.0
    $region41: #{tpu_custom_call.1} parent=1 // pred_fallthru
      _
    %v87 = vld [vmem:[#allocation2] sm:$0xff]
    %v88 = vld [vmem:[#allocation2 + $0x8] sm:$0xff]
    %v89 = vld [vmem:[#allocation5] sm:$0xff]
    %v90 = vld [vmem:[#allocation5 + $0x8] sm:$0xff]
    %v91 = vld [vmem:[#allocation11] sm:$0xff]
    %v92 = vld [vmem:[#allocation11 + $0x8] sm:$0xff]
    %v93 = vld [vmem:[#allocation11 + $0x10] sm:$0xff]
    %v94 = vld [vmem:[#allocation11 + $0x18] sm:$0xff]
    %vm95 = vcmask 261120
    %v97 = vsel %vm95, %v89, 0
    %v100 = vsel %vm95, %v90, 0
    %102 = vmatprep.subr.mxu0 0.0
    %103 = vmatpush1.msra.mxu0 %v91
    %104 = vmatprep.subr.mxu0 0.0
    %105 = vmatpush1.msra.mxu0 %v92
    %106 = vmatprep.subr.mxu0 0.0
    %107 = vmatpush1.msra.mxu0 %v93
    %108 = vmatprep.subr.mxu0 0.0
    %109 = vmatpush1.msra.mxu0 %v94
    %110 = vmatprep.subr.mxu0 0.0
    %111 = vmatpush1.msra.mxu0 0.0
    %112 = vmatprep.subr.mxu0 0.0
    %113 = vmatpush1.msra.mxu0 0.0
    %114 = vmatprep.subr.mxu0 0.0
    %115 = vmatpush1.msra.mxu0 0.0
    %116 = vmatprep.subr.mxu0 0.0
    %117 = vmatpush1.msra.mxu0 0.0
    %118 = vmatprep.subr.mxu0 0.0
    %119 = vmatpush1.msra.mxu0 0.0
    %120 = vmatprep.subr.mxu0 0.0
    %121 = vmatpush1.msra.mxu0 0.0
    %122 = vmatprep.subr.mxu0 0.0
    %123 = vmatpush1.msra.mxu0 0.0
    %124 = vmatprep.subr.mxu0 0.0
    %125 = vmatpush1.msra.mxu0 0.0
    %126 = vmatprep.subr.mxu0 0.0
    %127 = vmatpush1.msra.mxu0 0.0
    %128 = vmatprep.subr.mxu0 0.0
    %129 = vmatpush1.msra.mxu0 0.0
    %130 = vmatprep.subr.mxu0 0.0
    %131 = vmatpush1.msra.mxu0 0.0
    %132 = vmatprep.subr.mxu0 0.0
    %133 = vmatpush1.msra.mxu0 0.0
    %134 = vmatprep.subr.mxu0 0.0
    %135 = vmatpush1.msra.mxu0 0.0
    %136 = vmatprep.subr.mxu0 0.0
    %137 = vmatpush1.msra.mxu0 0.0
    %138 = vmatprep.subr.mxu0 0.0
    %139 = vmatpush1.msra.mxu0 0.0
    %140 = vmatprep.subr.mxu0 0.0
    %141 = vmatpush1.msra.mxu0 0.0
    %142 = vmatprep.subr.mxu0 0.0
    %143 = vmatpush1.msra.mxu0 0.0
    %144 = vmatprep.subr.mxu0 0.0
    %145 = vmatpush1.msra.mxu0 0.0
    %146 = vmatprep.subr.mxu0 0.0
    %147 = vmatpush1.msra.mxu0 0.0
    %148 = vmatprep.subr.mxu0 0.0
    %149 = vmatpush1.msra.mxu0 0.0
    %150 = vmatprep.subr.mxu0 0.0
    %151 = vmatpush1.msra.mxu0 0.0
    %152 = vmatprep.subr.mxu0 0.0
    %153 = vmatpush1.msra.mxu0 0.0
    %154 = vmatprep.subr.mxu0 0.0
    %155 = vmatpush1.msra.mxu0 0.0
    %156 = vmatprep.subr.mxu0 0.0
    %157 = vmatpush1.msra.mxu0 0.0
    %158 = vmatprep.subr.mxu0 0.0
    %159 = vmatpush1.msra.mxu0 0.0
    %160 = vmatprep.subr.mxu0 0.0
    %161 = vmatpush1.msra.mxu0 0.0
    %162 = vmatprep.subr.mxu0 0.0
    %163 = vmatpush1.msra.mxu0 0.0
    %164 = vmatprep.subr.mxu0 0.0
    %165 = vmatpush1.msra.mxu0 0.0
    %166 = vmatprep.mubr.f32.mxu0 0.0
    %167 = vmatmul.mubr.f32.gmra.mrb[0].mxu0 %v97
    %v168 = vpop.f32.mrb[0].mxu0
    %v169 = vadd.f32 0.0, %v168
    %v170 = vpop.f32.mrb[0].mxu0
    %171 = vmatprep.mubr.f32.mxu0 0.0
    %172 = vmatmul.mubr.f32.gmra.mrb[0].mxu0 %v100
    %v173 = vpop.f32.mrb[0].mxu0
    %v174 = vadd.f32 0.0, %v173
    %v175 = vpop.f32.mrb[0].mxu0
    %176 = vdwg.mxu0
    %v177 = vadd.f32 %v87, %v169
    %v178 = vadd.f32 %v88, %v174
    %179 = vst.msk [vmem:[#allocation2] sm:$0xff] %vm95, %v177
    %180 = vst.msk [vmem:[#allocation2 + $0x8] sm:$0xff] %vm95, %v178
    %v181 = vld [vmem:[#allocation3] sm:$0xff]
    %v182 = vld [vmem:[#allocation3 + $0x8] sm:$0xff]
    %v183 = vld [vmem:[#allocation8] sm:$0xff]
    %v184 = vld [vmem:[#allocation8 + $0x8] sm:$0xff]
    %s185 = scalar_lea.vmem [#allocation11], 32
    %v186 = vld [vmem:[%s185] sm:$0xff]
    %v187 = vld [vmem:[%s185 + $0x8] sm:$0xff]
    %v188 = vld [vmem:[%s185 + $0x10] sm:$0xff]
    %v189 = vld [vmem:[%s185 + $0x18] sm:$0xff]
    %v191 = vsel %vm95, %v183, 0
    %v194 = vsel %vm95, %v184, 0
    %196 = vmatprep.subr.mxu0 0.0
    %197 = vmatpush1.msra.mxu0 %v186
    %198 = vmatprep.subr.mxu0 0.0
    %199 = vmatpush1.msra.mxu0 %v187
    %200 = vmatprep.subr.mxu0 0.0
    %201 = vmatpush1.msra.mxu0 %v188
    %202 = vmatprep.subr.mxu0 0.0
    %203 = vmatpush1.msra.mxu0 %v189
    %204 = vmatprep.subr.mxu0 0.0
    %205 = vmatpush1.msra.mxu0 0.0
    %206 = vmatprep.subr.mxu0 0.0
    %207 = vmatpush1.msra.mxu0 0.0
    %208 = vmatprep.subr.mxu0 0.0
    %209 = vmatpush1.msra.mxu0 0.0
    %210 = vmatprep.subr.mxu0 0.0
    %211 = vmatpush1.msra.mxu0 0.0
    %212 = vmatprep.subr.mxu0 0.0
    %213 = vmatpush1.msra.mxu0 0.0
    %214 = vmatprep.subr.mxu0 0.0
    %215 = vmatpush1.msra.mxu0 0.0
    %216 = vmatprep.subr.mxu0 0.0
    %217 = vmatpush1.msra.mxu0 0.0
    %218 = vmatprep.subr.mxu0 0.0
    %219 = vmatpush1.msra.mxu0 0.0
    %220 = vmatprep.subr.mxu0 0.0
    %221 = vmatpush1.msra.mxu0 0.0
    %222 = vmatprep.subr.mxu0 0.0
    %223 = vmatpush1.msra.mxu0 0.0
    %224 = vmatprep.subr.mxu0 0.0
    %225 = vmatpush1.msra.mxu0 0.0
    %226 = vmatprep.subr.mxu0 0.0
    %227 = vmatpush1.msra.mxu0 0.0
    %228 = vmatprep.subr.mxu0 0.0
    %229 = vmatpush1.msra.mxu0 0.0
    %230 = vmatprep.subr.mxu0 0.0
    %231 = vmatpush1.msra.mxu0 0.0
    %232 = vmatprep.subr.mxu0 0.0
    %233 = vmatpush1.msra.mxu0 0.0
    %234 = vmatprep.subr.mxu0 0.0
    %235 = vmatpush1.msra.mxu0 0.0
    %236 = vmatprep.subr.mxu0 0.0
    %237 = vmatpush1.msra.mxu0 0.0
    %238 = vmatprep.subr.mxu0 0.0
    %239 = vmatpush1.msra.mxu0 0.0
    %240 = vmatprep.subr.mxu0 0.0
    %241 = vmatpush1.msra.mxu0 0.0
    %242 = vmatprep.subr.mxu0 0.0
    %243 = vmatpush1.msra.mxu0 0.0
    %244 = vmatprep.subr.mxu0 0.0
    %245 = vmatpush1.msra.mxu0 0.0
    %246 = vmatprep.subr.mxu0 0.0
    %247 = vmatpush1.msra.mxu0 0.0
    %248 = vmatprep.subr.mxu0 0.0
    %249 = vmatpush1.msra.mxu0 0.0
    %250 = vmatprep.subr.mxu0 0.0
    %251 = vmatpush1.msra.mxu0 0.0
    %252 = vmatprep.subr.mxu0 0.0
    %253 = vmatpush1.msra.mxu0 0.0
    %254 = vmatprep.subr.mxu0 0.0
    %255 = vmatpush1.msra.mxu0 0.0
    %256 = vmatprep.subr.mxu0 0.0
    %257 = vmatpush1.msra.mxu0 0.0
    %258 = vmatprep.subr.mxu0 0.0
    %259 = vmatpush1.msra.mxu0 0.0
    %260 = vmatprep.mubr.f32.mxu0 0.0
    %261 = vmatmul.mubr.f32.gmra.mrb[0].mxu0 %v191
    %v262 = vpop.f32.mrb[0].mxu0
    %v263 = vadd.f32 0.0, %v262
    %v264 = vpop.f32.mrb[0].mxu0
    %265 = vmatprep.mubr.f32.mxu0 0.0
    %266 = vmatmul.mubr.f32.gmra.mrb[0].mxu0 %v194
    %v267 = vpop.f32.mrb[0].mxu0
    %v268 = vadd.f32 0.0, %v267
    %v269 = vpop.f32.mrb[0].mxu0
    %270 = vdwg.mxu0
    %v271 = vadd.f32 %v181, %v263
    %v272 = vadd.f32 %v182, %v268
    %273 = vst.msk [vmem:[#allocation3] sm:$0xff] %vm95, %v271
    %274 = vst.msk [vmem:[#allocation3 + $0x8] sm:$0xff] %vm95, %v272
    %v275 = vld [vmem:[#allocation4] sm:$0xff]
    %v276 = vld [vmem:[#allocation4 + $0x8] sm:$0xff]
    %v277 = vld [vmem:[#allocation10] sm:$0xff]
    %v278 = vld [vmem:[#allocation10 + $0x8] sm:$0xff]
    %s279 = scalar_lea.vmem [#allocation11], 64
    %v280 = vld [vmem:[%s279] sm:$0xff]
    %v281 = vld [vmem:[%s279 + $0x8] sm:$0xff]
    %v282 = vld [vmem:[%s279 + $0x10] sm:$0xff]
    %v283 = vld [vmem:[%s279 + $0x18] sm:$0xff]
    %v285 = vsel %vm95, %v277, 0
    %v288 = vsel %vm95, %v278, 0
    %290 = vmatprep.subr.mxu0 0.0
    %291 = vmatpush1.msra.mxu0 %v280
    %292 = vmatprep.subr.mxu0 0.0
    %293 = vmatpush1.msra.mxu0 %v281
    %294 = vmatprep.subr.mxu0 0.0
    %295 = vmatpush1.msra.mxu0 %v282
    %296 = vmatprep.subr.mxu0 0.0
    %297 = vmatpush1.msra.mxu0 %v283
    %298 = vmatprep.subr.mxu0 0.0
    %299 = vmatpush1.msra.mxu0 0.0
    %300 = vmatprep.subr.mxu0 0.0
    %301 = vmatpush1.msra.mxu0 0.0
    %302 = vmatprep.subr.mxu0 0.0
    %303 = vmatpush1.msra.mxu0 0.0
    %304 = vmatprep.subr.mxu0 0.0
    %305 = vmatpush1.msra.mxu0 0.0
    %306 = vmatprep.subr.mxu0 0.0
    %307 = vmatpush1.msra.mxu0 0.0
    %308 = vmatprep.subr.mxu0 0.0
    %309 = vmatpush1.msra.mxu0 0.0
    %310 = vmatprep.subr.mxu0 0.0
    %311 = vmatpush1.msra.mxu0 0.0
    %312 = vmatprep.subr.mxu0 0.0
    %313 = vmatpush1.msra.mxu0 0.0
    %314 = vmatprep.subr.mxu0 0.0
    %315 = vmatpush1.msra.mxu0 0.0
    %316 = vmatprep.subr.mxu0 0.0
    %317 = vmatpush1.msra.mxu0 0.0
    %318 = vmatprep.subr.mxu0 0.0
    %319 = vmatpush1.msra.mxu0 0.0
    %320 = vmatprep.subr.mxu0 0.0
    %321 = vmatpush1.msra.mxu0 0.0
    %322 = vmatprep.subr.mxu0 0.0
    %323 = vmatpush1.msra.mxu0 0.0
    %324 = vmatprep.subr.mxu0 0.0
    %325 = vmatpush1.msra.mxu0 0.0
    %326 = vmatprep.subr.mxu0 0.0
    %327 = vmatpush1.msra.mxu0 0.0
    %328 = vmatprep.subr.mxu0 0.0
    %329 = vmatpush1.msra.mxu0 0.0
    %330 = vmatprep.subr.mxu0 0.0
    %331 = vmatpush1.msra.mxu0 0.0
    %332 = vmatprep.subr.mxu0 0.0
    %333 = vmatpush1.msra.mxu0 0.0
    %334 = vmatprep.subr.mxu0 0.0
    %335 = vmatpush1.msra.mxu0 0.0
    %336 = vmatprep.subr.mxu0 0.0
    %337 = vmatpush1.msra.mxu0 0.0
    %338 = vmatprep.subr.mxu0 0.0
    %339 = vmatpush1.msra.mxu0 0.0
    %340 = vmatprep.subr.mxu0 0.0
    %341 = vmatpush1.msra.mxu0 0.0
    %342 = vmatprep.subr.mxu0 0.0
    %343 = vmatpush1.msra.mxu0 0.0
    %344 = vmatprep.subr.mxu0 0.0
    %345 = vmatpush1.msra.mxu0 0.0
    %346 = vmatprep.subr.mxu0 0.0
    %347 = vmatpush1.msra.mxu0 0.0
    %348 = vmatprep.subr.mxu0 0.0
    %349 = vmatpush1.msra.mxu0 0.0
    %350 = vmatprep.subr.mxu0 0.0
    %351 = vmatpush1.msra.mxu0 0.0
    %352 = vmatprep.subr.mxu0 0.0
    %353 = vmatpush1.msra.mxu0 0.0
    %354 = vmatprep.mubr.f32.mxu0 0.0
    %355 = vmatmul.mubr.f32.gmra.mrb[0].mxu0 %v285
    %v356 = vpop.f32.mrb[0].mxu0
    %v357 = vadd.f32 0.0, %v356
    %v358 = vpop.f32.mrb[0].mxu0
    %359 = vmatprep.mubr.f32.mxu0 0.0
    %360 = vmatmul.mubr.f32.gmra.mrb[0].mxu0 %v288
    %v361 = vpop.f32.mrb[0].mxu0
    %v362 = vadd.f32 0.0, %v361
    %v363 = vpop.f32.mrb[0].mxu0
    %364 = vdwg.mxu0
    %v365 = vadd.f32 %v275, %v357
    %v366 = vadd.f32 %v276, %v362
    %367 = vst.msk [vmem:[#allocation4] sm:$0xff] %vm95, %v365
    %368 = vst.msk [vmem:[#allocation4 + $0x8] sm:$0xff] %vm95, %v366
    // Predicated region
    $region42: #{tpu_custom_call.1} parent=1 // pred_check
      %p369 = pneg %p76
    $region43: #{tpu_custom_call.1} parent=1 // pred_check_branch
      %371 = sbr.rel (%p369) target = $region45
    $region44: #{tpu_custom_call.1} parent=1 // pred_region
      %v372 = vld [vmem:[%s4] sm:$0x1]
      %v373 = vld [vmem:[%s4 + $0x1] sm:$0x1]
      %v374 = vld [vmem:[%s4 + $0x2] sm:$0x1]
      %v375 = vld [vmem:[#allocation2] sm:$0xff]
      %v376 = vld [vmem:[#allocation2 + $0x8] sm:$0xff]
      %v378 = vlaneseq
      %v379 = vshrl.u32 %v378, 7
      %v380 = vsub.s32 0, %v379
      %v381 = vrot.slane %v372, %v380
      %v383 = vadd.f32 %v375, %v381
      %v384 = vadd.f32 %v376, %v381
      %385 = vst.msk [vmem:[#allocation13] sm:$0xff] %vm95, %v383
      %386 = vst.msk [vmem:[#allocation13 + $0x8] sm:$0xff] %vm95, %v384
      %v387 = vld [vmem:[#allocation3] sm:$0xff]
      %v388 = vld [vmem:[#allocation3 + $0x8] sm:$0xff]
      %v390 = vlaneseq
      %v391 = vshrl.u32 %v390, 7
      %v392 = vsub.s32 0, %v391
      %v393 = vrot.slane %v373, %v392
      %v395 = vadd.f32 %v387, %v393
      %v396 = vadd.f32 %v388, %v393
      %399 = vrot.lane.b32.xlu0 %v395, 32
      %v400 = vpop.permute.xlu0 %399
      %401 = vrot.lane.b32.xlu0 %v396, 32
      %v402 = vpop.permute.xlu0 %401
      %vm405 = vcmask 523520
      %406 = vst.msk [vmem:[#allocation13] sm:$0xff] %vm405, %v400
      %407 = vst.msk [vmem:[#allocation13 + $0x8] sm:$0xff] %vm405, %v402
      %v408 = vld [vmem:[#allocation4] sm:$0xff]
      %v409 = vld [vmem:[#allocation4 + $0x8] sm:$0xff]
      %v411 = vlaneseq
      %v412 = vshrl.u32 %v411, 7
      %v413 = vsub.s32 0, %v412
      %v414 = vrot.slane %v374, %v413
      %v416 = vadd.f32 %v408, %v414
      %v417 = vadd.f32 %v409, %v414
      %420 = vrot.lane.b32.xlu0 %v416, 64
      %v421 = vpop.permute.xlu0 %420
      %422 = vrot.lane.b32.xlu0 %v417, 64
      %v423 = vpop.permute.xlu0 %422
      %vm426 = vcmask 785920
      %427 = vst.msk [vmem:[#allocation13] sm:$0xff] %vm426, %v421
      %428 = vst.msk [vmem:[#allocation13 + $0x8] sm:$0xff] %vm426, %v423
    $region45: #{tpu_custom_call.1} parent=1 // pred_fallthru
      _
    // Predicated region
    $region46: #{tpu_custom_call.1} parent=1 // pred_check
      _
    $region47: #{tpu_custom_call.1} parent=1 // pred_check_branch
      %430 = sbr.rel (0) target = $region49
    $region48: #{tpu_custom_call.1} parent=1 // pred_region
      %s432 = ssub.s32 256, 256
      %433 = vsyncadd [#allocation7], %s432
      %s434 = sshll.u32 [#allocation13], 4
      %s435 = int_to_ptr.vmem [resolvable:$true] %s434
      %440 = dma.vmem_to_hbm [thread:$0]  %s435, 256, %s5, [#allocation7], 128, 128, 8
    $region49: #{tpu_custom_call.1} parent=1 // pred_fallthru
      _
    // Predicated region
    $region50: #{tpu_custom_call.1} parent=1 // pred_check
      _
    $region51: #{tpu_custom_call.1} parent=1 // pred_check_branch
      %442 = sbr.rel (0) target = $region53
    $region52: #{tpu_custom_call.1} parent=1 // pred_region
      %443 = dma.done [#allocation7], 256
    $region53: #{tpu_custom_call.1} parent=1 // pred_fallthru
      _
    %444 = vsyncpa [#allocation6], 1
    %445 = vsyncpa [#allocation9], 1
    %446 = vsyncpa [#allocation12], 1
    %447 = vsyncpa [#allocation7], 1

</llo_original>
